<compile_context>
chip_gen: v7x
topology: tpu7x:2x2x1
jax: 0.10.0
libtpu: 0.0.40
codegen_flags: <defaults>
</compile_context>

<pallas_src>
import jax
import jax.numpy as jnp
from jax.experimental import pallas as pl
from jax.experimental.pallas import tpu as pltpu


def _round_up(n, m):
    return (n + m - 1) // m * m


def init_params(key, input_features, output_features, hidden_layers=64):
    """PyTorch nn.Linear-style init (uniform +/- 1/sqrt(fan_in))."""
    def linear_init(k, fan_in, fan_out):
        kw, kb = jax.random.split(k)
        bound = 1.0 / jnp.sqrt(float(fan_in))
        w = jax.random.uniform(kw, (fan_in, fan_out), jnp.float32, -bound, bound)
        b = jax.random.uniform(kb, (fan_out,), jnp.float32, -bound, bound)
        return w, b

    k1, k2, k3, k4 = jax.random.split(key, 4)
    w1, b1 = linear_init(k1, input_features, hidden_layers)
    w2, b2 = linear_init(k2, hidden_layers, hidden_layers)
    w3, b3 = linear_init(k3, hidden_layers, hidden_layers)
    w4, b4 = linear_init(k4, hidden_layers, output_features)
    return {"w1": w1, "b1": b1, "w2": w2, "b2": b2,
            "w3": w3, "b3": b3, "w4": w4, "b4": b4}


def pack_params(params, input_features, output_features, hidden=64):
    """Pack all 4 weights AND all 4 biases into ONE bf16 (rows, lanes) buffer.

    Row layout (lanes = 128 for hidden<=128, out<=128):
      [0,              in_pad)           : W1  (in_pad x lanes, zero-padded)
      [in_pad,         in_pad +  lanes)  : W2  (lanes x lanes, zero-padded)
      [in_pad+lanes,   in_pad + 2*lanes) : W3
      [in_pad+2*lanes, in_pad + 3*lanes) : W4
      [in_pad+3*lanes, in_pad+3*lanes+4) : b1, b2, b3, b4 (one row each)
    in_pad is a multiple of 16 so every slice offset is bf16-sublane aligned.
    """
    in_pad = _round_up(input_features, 16)
    lanes = max(_round_up(hidden, 128), _round_up(output_features, 128))

    def pad2(w, rows, cols):
        return jnp.pad(w, ((0, rows - w.shape[0]), (0, cols - w.shape[1])))

    def padb(b, cols):
        b2 = b.reshape(1, -1)
        return jnp.pad(b2, ((0, 0), (0, cols - b2.shape[1])))

    packed = jnp.concatenate([
        pad2(params["w1"], in_pad, lanes),
        pad2(params["w2"], lanes, lanes),
        pad2(params["w3"], lanes, lanes),
        pad2(params["w4"], lanes, lanes),
        padb(params["b1"], lanes),
        padb(params["b2"], lanes),
        padb(params["b3"], lanes),
        padb(params["b4"], lanes),
    ], axis=0).astype(jnp.bfloat16)
    return packed


def multi_model_forward(x, w_packed, *, input_features, output_features,
                        hidden=64):
    """x: (batch, input_features) f32 -> (batch, output_features) f32."""
    batch = x.shape[0]
    in_pad = _round_up(input_features, 16)
    lanes = w_packed.shape[1]
    w_rows = w_packed.shape[0]
    assert w_rows == in_pad + 3 * lanes + 4

    # Narrow (8-lane) f32 output: cuts HBM writeback 16x vs a 128-lane pad.
    out_cols = _round_up(output_features, 8)

    # Batch tiling: single tile for tiny batches; >=2 tiles for batch > 8 so
    # both v7x TensorCores get work; cap at 512 rows (85%+ of HBM roofline).
    TM_MAX = 512
    if batch <= 8:
        tm = _round_up(batch, 8)
    else:
        n_tiles = max(2, pl.cdiv(batch, TM_MAX))
        tm = min(TM_MAX, _round_up(pl.cdiv(batch, n_tiles), 8))
    grid = (pl.cdiv(batch, tm),)

    # Pad ONLY the feature axis (zeros are required: padded columns feed the
    # contraction).  Batch axis stays ragged; OOB rows of the last tile are
    # garbage-in / dropped-on-write and never mix across rows.
    x_pad = jnp.pad(x, ((0, 0), (0, in_pad - input_features)))

    r1 = 0
    r2 = in_pad
    r3 = in_pad + lanes
    r4 = in_pad + 2 * lanes
    rb = in_pad + 3 * lanes

    def mlp_kernel(x_ref, w_ref, o_ref):
        b = w_ref[rb:rb + 4, :].astype(jnp.float32)      # (4, lanes), loaded once
        xt = x_ref[...].astype(jnp.bfloat16)             # (tm, in_pad)

        # Layer 1: Linear + ReLU (bf16 operands, f32 MXU accumulation)
        h = jnp.dot(xt, w_ref[r1:r1 + in_pad, :],
                    preferred_element_type=jnp.float32) + b[0:1, :]
        h = jnp.maximum(h, 0.0)

        # Layer 2: Linear + ReLU (full lane-dense 128-wide; pad cols stay 0)
        h = jnp.dot(h.astype(jnp.bfloat16), w_ref[r2:r2 + lanes, :],
                    preferred_element_type=jnp.float32) + b[1:2, :]
        h = jnp.maximum(h, 0.0)

        # Layer 3: Linear + ReLU
        h = jnp.dot(h.astype(jnp.bfloat16), w_ref[r3:r3 + lanes, :],
                    preferred_element_type=jnp.float32) + b[2:3, :]
        h = jnp.maximum(h, 0.0)

        # Layer 4: Linear; store only the narrow (out_cols) output columns.
        y = jnp.dot(h.astype(jnp.bfloat16), w_ref[r4:r4 + lanes, :],
                    preferred_element_type=jnp.float32) + b[3:4, :]
        o_ref[...] = y[:, :out_cols].astype(o_ref.dtype)

    out = pl.pallas_call(
        mlp_kernel,
        out_shape=jax.ShapeDtypeStruct((batch, out_cols), jnp.float32),
        grid_spec=pltpu.PrefetchScalarGridSpec(
            num_scalar_prefetch=0,
            grid=grid,
            in_specs=[
                pl.BlockSpec((tm, in_pad), lambda i: (i, 0)),        # x tile
                pl.BlockSpec((w_rows, lanes), lambda i: (0, 0)),     # resident params
            ],
            out_specs=pl.BlockSpec((tm, out_cols), lambda i: (i, 0)),
        ),
        compiler_params=pltpu.CompilerParams(
            dimension_semantics=("parallel",)),
    )(x_pad, w_packed)

    return out[:, :output_features]


def reference_forward_f32(x, params):
    """Pure-f32 reference (exact PyTorch semantics)."""
    h = jnp.maximum(x @ params["w1"] + params["b1"], 0.0)
    h = jnp.maximum(h @ params["w2"] + params["b2"], 0.0)
    h = jnp.maximum(h @ params["w3"] + params["b3"], 0.0)
    return h @ params["w4"] + params["b4"]


def reference_forward_bf16(x, params):
    """Reference mirroring the kernel's bf16 weight/bias/activation rounding."""
    bf = lambda v: v.astype(jnp.bfloat16).astype(jnp.float32)
    h = jnp.maximum(bf(x) @ bf(params["w1"]) + bf(params["b1"]), 0.0)
    h = jnp.maximum(bf(h) @ bf(params["w2"]) + bf(params["b2"]), 0.0)
    h = jnp.maximum(bf(h) @ bf(params["w3"]) + bf(params["b3"]), 0.0)
    return bf(h) @ bf(params["w4"]) + bf(params["b4"])


if __name__ == "__main__":
    key = jax.random.PRNGKey(0)
    k_params, k_x1, k_x2 = jax.random.split(key, 3)

    input_features = 4      # small feature-classification problem
    output_features = 3     # multi-class logits
    hidden_layers = 64

    params = init_params(k_params, input_features, output_features, hidden_layers)
    w_packed = pack_params(params, input_features, output_features, hidden_layers)

    # Case 1: tiny batch (single tile, launch-bound path).
    x1 = jax.random.normal(k_x1, (8, input_features), dtype=jnp.float32)
    out1 = jax.block_until_ready(
        multi_model_forward(x1, w_packed,
                            input_features=input_features,
                            output_features=output_features,
                            hidden=hidden_layers))
    assert out1.shape == (8, output_features)
    assert jnp.allclose(out1, reference_forward_bf16(x1, params),
                        atol=5e-3, rtol=5e-3)
    assert jnp.allclose(out1, reference_forward_f32(x1, params),
                        atol=5e-2, rtol=5e-2)

    # Case 2: ragged batch (2 grid steps, exercises OOB last-tile masking).
    x2 = jax.random.normal(k_x2, (37, input_features), dtype=jnp.float32)
    out2 = jax.block_until_ready(
        multi_model_forward(x2, w_packed,
                            input_features=input_features,
                            output_features=output_features,
                            hidden=hidden_layers))
    assert out2.shape == (37, output_features)
    assert jnp.allclose(out2, reference_forward_bf16(x2, params),
                        atol=5e-3, rtol=5e-3)
    assert jnp.allclose(out2, reference_forward_f32(x2, params),
                        atol=5e-2, rtol=5e-2)

    print("KERNEL_OK")
</pallas_src>

<mosaic_0001>
module attributes {stable_mosaic.version = 11 : i64} {
  func.func @mlp_kernel(%arg0: i32, %arg1: memref<8x16xf32, #tpu.memory_space<vmem>>, %arg2: memref<404x128xbf16, #tpu.memory_space<vmem>>, %arg3: memref<8x8xf32, #tpu.memory_space<vmem>>) attributes {dimension_semantics = [#tpu.dimension_semantics<parallel>], iteration_bounds = array<i64: 1>, scalar_prefetch = 0 : i64, scratch_operands = 0 : i64, tpu.core_type = #tpu.core_type<tc>, window_params = [{transform_indices = @transform_0, window_bounds = array<i64: 8, 16>}, {pipeline_mode = #tpu.pipeline_mode<synchronous>, transform_indices = @transform_1, window_bounds = array<i64: 404, 128>}, {transform_indices = @transform_2, window_bounds = array<i64: 8, 8>}]} {
    %c400 = arith.constant 400 : index
    %c0 = arith.constant 0 : index
    %0 = vector.load %arg2[%c400, %c0] : memref<404x128xbf16, #tpu.memory_space<vmem>>, vector<4x128xbf16>
    %1 = arith.extf %0 : vector<4x128xbf16> to vector<4x128xf32>
    %c0_0 = arith.constant 0 : index
    %c0_1 = arith.constant 0 : index
    %2 = vector.load %arg1[%c0_0, %c0_1] : memref<8x16xf32, #tpu.memory_space<vmem>>, vector<8x16xf32>
    %3 = arith.truncf %2 : vector<8x16xf32> to vector<8x16xbf16>
    %c0_2 = arith.constant 0 : index
    %c0_3 = arith.constant 0 : index
    %4 = vector.load %arg2[%c0_2, %c0_3] : memref<404x128xbf16, #tpu.memory_space<vmem>>, vector<16x128xbf16>
    %cst = arith.constant dense<0.000000e+00> : vector<8x128xf32>
    %5 = tpu.matmul %3, %4, %cst {dimension_numbers = #tpu.dot_dimension_numbers<[1], [0], [0], [1], [0, 0, 1, 1], [], []>} : vector<8x16xbf16>, vector<16x128xbf16>, vector<8x128xf32> -> vector<8x128xf32>
    %6 = vector.extract_strided_slice %1 {offsets = [0, 0], sizes = [1, 128], strides = [1, 1]} : vector<4x128xf32> to vector<1x128xf32>
    %7 = vector.broadcast %6 : vector<1x128xf32> to vector<8x128xf32>
    %8 = arith.addf %5, %7 : vector<8x128xf32>
    %cst_4 = arith.constant 0.000000e+00 : f32
    %9 = vector.broadcast %cst_4 : f32 to vector<8x128xf32>
    %10 = arith.maximumf %8, %9 : vector<8x128xf32>
    %11 = arith.truncf %10 : vector<8x128xf32> to vector<8x128xbf16>
    %c16 = arith.constant 16 : index
    %c0_5 = arith.constant 0 : index
    %12 = vector.load %arg2[%c16, %c0_5] : memref<404x128xbf16, #tpu.memory_space<vmem>>, vector<128x128xbf16>
    %cst_6 = arith.constant dense<0.000000e+00> : vector<8x128xf32>
    %13 = tpu.matmul %11, %12, %cst_6 {dimension_numbers = #tpu.dot_dimension_numbers<[1], [0], [0], [1], [0, 0, 1, 1], [], []>} : vector<8x128xbf16>, vector<128x128xbf16>, vector<8x128xf32> -> vector<8x128xf32>
    %14 = vector.extract_strided_slice %1 {offsets = [1, 0], sizes = [1, 128], strides = [1, 1]} : vector<4x128xf32> to vector<1x128xf32>
    %15 = vector.broadcast %14 : vector<1x128xf32> to vector<8x128xf32>
    %16 = arith.addf %13, %15 : vector<8x128xf32>
    %cst_7 = arith.constant 0.000000e+00 : f32
    %17 = vector.broadcast %cst_7 : f32 to vector<8x128xf32>
    %18 = arith.maximumf %16, %17 : vector<8x128xf32>
    %19 = arith.truncf %18 : vector<8x128xf32> to vector<8x128xbf16>
    %c144 = arith.constant 144 : index
    %c0_8 = arith.constant 0 : index
    %20 = vector.load %arg2[%c144, %c0_8] : memref<404x128xbf16, #tpu.memory_space<vmem>>, vector<128x128xbf16>
    %cst_9 = arith.constant dense<0.000000e+00> : vector<8x128xf32>
    %21 = tpu.matmul %19, %20, %cst_9 {dimension_numbers = #tpu.dot_dimension_numbers<[1], [0], [0], [1], [0, 0, 1, 1], [], []>} : vector<8x128xbf16>, vector<128x128xbf16>, vector<8x128xf32> -> vector<8x128xf32>
    %22 = vector.extract_strided_slice %1 {offsets = [2, 0], sizes = [1, 128], strides = [1, 1]} : vector<4x128xf32> to vector<1x128xf32>
    %23 = vector.broadcast %22 : vector<1x128xf32> to vector<8x128xf32>
    %24 = arith.addf %21, %23 : vector<8x128xf32>
    %cst_10 = arith.constant 0.000000e+00 : f32
    %25 = vector.broadcast %cst_10 : f32 to vector<8x128xf32>
    %26 = arith.maximumf %24, %25 : vector<8x128xf32>
    %27 = arith.truncf %26 : vector<8x128xf32> to vector<8x128xbf16>
    %c272 = arith.constant 272 : index
    %c0_11 = arith.constant 0 : index
    %28 = vector.load %arg2[%c272, %c0_11] : memref<404x128xbf16, #tpu.memory_space<vmem>>, vector<128x128xbf16>
    %cst_12 = arith.constant dense<0.000000e+00> : vector<8x128xf32>
    %29 = tpu.matmul %27, %28, %cst_12 {dimension_numbers = #tpu.dot_dimension_numbers<[1], [0], [0], [1], [0, 0, 1, 1], [], []>} : vector<8x128xbf16>, vector<128x128xbf16>, vector<8x128xf32> -> vector<8x128xf32>
    %30 = vector.extract_strided_slice %1 {offsets = [3, 0], sizes = [1, 128], strides = [1, 1]} : vector<4x128xf32> to vector<1x128xf32>
    %31 = vector.broadcast %30 : vector<1x128xf32> to vector<8x128xf32>
    %32 = arith.addf %29, %31 : vector<8x128xf32>
    %33 = vector.extract_strided_slice %32 {offsets = [0, 0], sizes = [8, 8], strides = [1, 1]} : vector<8x128xf32> to vector<8x8xf32>
    %c0_13 = arith.constant 0 : index
    %c0_14 = arith.constant 0 : index
    %34 = vector.load %arg3[%c0_13, %c0_14] : memref<8x8xf32, #tpu.memory_space<vmem>>, vector<8x8xf32>
    tpu.vector_store %arg3[%c0_13, %c0_14], %33 {strides = array<i32>} : memref<8x8xf32, #tpu.memory_space<vmem>>, vector<8x8xf32>,
    return
  }
  func.func @transform_0(%arg0: i32) -> (i32, i32) {
    %c0_i32 = arith.constant 0 : i32
    %c0_i32_0 = arith.constant 0 : i32
    return %arg0, %c0_i32 : i32, i32
  }
  func.func @transform_1(%arg0: i32) -> (i32, i32) {
    %c0_i32 = arith.constant 0 : i32
    %c0_i32_0 = arith.constant 0 : i32
    %c0_i32_1 = arith.constant 0 : i32
    return %c0_i32, %c0_i32_0 : i32, i32
  }
  func.func @transform_2(%arg0: i32) -> (i32, i32) {
    %c0_i32 = arith.constant 0 : i32
    %c0_i32_0 = arith.constant 0 : i32
    return %arg0, %c0_i32 : i32, i32
  }
}

</mosaic_0001>

<llo_original>
// kernel: tpu_custom_call.1
$region0: #{tpu_custom_call.1}
  #allocation0 [shape = 'u32[]', space=smem, size = 0x4, offset = 0x4, fixed_abs, tag = 'smem constant byte address 0x4 - core index']
  #allocation1 [shape = 'u32[144,128]{1,0:T(1,128)}', space=vmem, size = 0x12000, scoped, tag = 'internal scratch']
  %s0 = inlined_call_operand.hbm [shape: f32[8,16], index: 0, kind: input, shape index: {}]
  %s1 = inlined_call_operand.hbm [shape: bf16[404,128], index: 1, kind: input, shape index: {}]
  %s2 = inlined_call_operand.hbm [shape: f32[8,8], index: 2, kind: output, shape index: {}]
  %s3 = sld [smem:[#allocation0]]
  $region26: #{tpu_custom_call.1} parent=0
    _
  %s5 = ssub.s32 1, %s3
  %s6 = scalar_select 0, %s5, %s3
  $region1: #{tpu_custom_call.1} parent=0
    #allocation2 [shape = 'u8[4096]{0}', space=vmem, size = 0x1000, scoped, tag = 'input window, operand 0, single buffered']
    #allocation3 [shape = 's32[1]{0}', space=sflag, size = 0x4, scoped, tag = 'scoped memory for tpu_custom_call.1']
    #allocation4 [shape = 's32[1]{0}', space=sflag, size = 0x4, scoped, tag = 'scoped memory for tpu_custom_call.1']
    #allocation5 [shape = 'u8[104448]{0}', space=vmem, size = 0x19800, scoped, tag = 'input window, operand 1, single buffered']
    #allocation6 [shape = 's32[1]{0}', space=sflag, size = 0x4, scoped, tag = 'scoped memory for tpu_custom_call.1']
    #allocation7 [shape = 'u8[4096]{0}', space=vmem, size = 0x1000, scoped, tag = 'output window, operand 0, single buffered']
    %7 = vsyncpa [#allocation3], 0
    %8 = vsyncpa [#allocation6], 0
    %9 = vsyncpa [#allocation4], 0
    // Predicated region
    $region2: #{tpu_custom_call.1} parent=1 // pred_check
      _
    $region3: #{tpu_custom_call.1} parent=1 // pred_check_branch
      %11 = sbr.rel (0) target = $region5
    $region4: #{tpu_custom_call.1} parent=1 // pred_region
      %s13 = ssub.s32 128, 128
      %14 = vsyncadd [#allocation3], %s13
      %s16 = sshll.u32 [#allocation2], 4
      %s17 = int_to_ptr.vmem [resolvable:$true] %s16
      %19 = dma.hbm_to_vmem [thread:$0]  %s0, 128, %s17, [#allocation3]
    $region5: #{tpu_custom_call.1} parent=1 // pred_fallthru
      _
    // Predicated region
    $region6: #{tpu_custom_call.1} parent=1 // pred_check
      _
    $region7: #{tpu_custom_call.1} parent=1 // pred_check_branch
      %21 = sbr.rel (0) target = $region9
    $region8: #{tpu_custom_call.1} parent=1 // pred_region
      %s23 = ssub.s32 3264, 3264
      %24 = vsyncadd [#allocation6], %s23
      %s25 = sshll.u32 [#allocation5], 4
      %s26 = int_to_ptr.vmem [resolvable:$true] %s25
      %31 = dma.hbm_to_vmem [thread:$0]  %s1, 3264, %s26, [#allocation6], 64, 64, 4
    $region9: #{tpu_custom_call.1} parent=1 // pred_fallthru
      _
    // Predicated region
    $region10: #{tpu_custom_call.1} parent=1 // pred_check
      _
    $region11: #{tpu_custom_call.1} parent=1 // pred_check_branch
      %33 = sbr.rel (0) target = $region13
    $region12: #{tpu_custom_call.1} parent=1 // pred_region
      %34 = dma.done [#allocation3], 128
    $region13: #{tpu_custom_call.1} parent=1 // pred_fallthru
      _
    // Predicated region
    $region14: #{tpu_custom_call.1} parent=1 // pred_check
      _
    $region15: #{tpu_custom_call.1} parent=1 // pred_check_branch
      %36 = sbr.rel (0) target = $region17
    $region16: #{tpu_custom_call.1} parent=1 // pred_region
      %37 = dma.done [#allocation6], 3264
    $region17: #{tpu_custom_call.1} parent=1 // pred_fallthru
      _
    %v39 = vld [vmem:[#allocation5 + $0xc8] sm:$0x3]
    %v40 = vunpack.c.l.bf16 %v39
    %v41 = vld [vmem:[#allocation2] sm:$0xff]
    %v42 = vpack.c.bf16 %v41, %v41
    %v43 = vld [vmem:[#allocation5] sm:$0xf]
    %v44 = vld [vmem:[#allocation5 + $0x4] sm:$0xf]
    %v45 = vlaneseq
    %v46 = vshrl.u32 %v45, 7
    %v47 = vsub.s32 0, %v46
    %v48 = vrot.slane %v40, %v47
    %v51 = vunpack.c.l.b16 %v43
    %v52 = vunpack.c.l.b16 %v44
    %v53 = vpack.c.b16 %v52, %v51
    %vm55 = vcmask 130048
    %v57 = vsel %vm55, %v42, 0
    %59 = vmatprep.subr.bf16.mxu0 0
    %60 = vmatpush1.bf16.msra.mxu0 %v53
    %61 = vmatprep.subr.bf16.mxu0 0
    %62 = vmatpush1.bf16.msra.mxu0 0
    %63 = vmatprep.subr.bf16.mxu0 0
    %64 = vmatpush1.bf16.msra.mxu0 0
    %65 = vmatprep.subr.bf16.mxu0 0
    %66 = vmatpush1.bf16.msra.mxu0 0
    %67 = vmatprep.subr.bf16.mxu0 0
    %68 = vmatpush1.bf16.msra.mxu0 0
    %69 = vmatprep.subr.bf16.mxu0 0
    %70 = vmatpush1.bf16.msra.mxu0 0
    %71 = vmatprep.subr.bf16.mxu0 0
    %72 = vmatpush1.bf16.msra.mxu0 0
    %73 = vmatprep.subr.bf16.mxu0 0
    %74 = vmatpush1.bf16.msra.mxu0 0
    %75 = vmatprep.subr.bf16.mxu0 0
    %76 = vmatpush1.bf16.msra.mxu0 0
    %77 = vmatprep.subr.bf16.mxu0 0
    %78 = vmatpush1.bf16.msra.mxu0 0
    %79 = vmatprep.subr.bf16.mxu0 0
    %80 = vmatpush1.bf16.msra.mxu0 0
    %81 = vmatprep.subr.bf16.mxu0 0
    %82 = vmatpush1.bf16.msra.mxu0 0
    %83 = vmatprep.subr.bf16.mxu0 0
    %84 = vmatpush1.bf16.msra.mxu0 0
    %85 = vmatprep.subr.bf16.mxu0 0
    %86 = vmatpush1.bf16.msra.mxu0 0
    %87 = vmatprep.subr.bf16.mxu0 0
    %88 = vmatpush1.bf16.msra.mxu0 0
    %89 = vmatprep.subr.bf16.mxu0 0
    %90 = vmatpush1.bf16.msra.mxu0 0
    %91 = vmatprep.mubr.bf16.mxu0 0
    %92 = vmatmul.mubr.bf16.gmra.mrb[0].mxu0 %v57
    %v93 = vpop.f32.mrb[0].mxu0
    %v94 = vadd.f32 %v48, %v93
    %v95 = vpop.f32.mrb[0].mxu0
    %v96 = vpop.f32.mrb[0].mxu0
    %v97 = vpop.f32.mrb[0].mxu0
    %98 = vdwg.mxu0
    %v99 = vmax.f32 %v94, 0.0
    %v100 = vpack.c.bf16 %v99, %v99
    %v101 = vld [vmem:[#allocation5 + $0x8] sm:$0xf]
    %v102 = vld [vmem:[#allocation5 + $0xc] sm:$0xf]
    %v103 = vld [vmem:[#allocation5 + $0x10] sm:$0xf]
    %v104 = vld [vmem:[#allocation5 + $0x14] sm:$0xf]
    %v105 = vld [vmem:[#allocation5 + $0x18] sm:$0xf]
    %v106 = vld [vmem:[#allocation5 + $0x1c] sm:$0xf]
    %v107 = vld [vmem:[#allocation5 + $0x20] sm:$0xf]
    %v108 = vld [vmem:[#allocation5 + $0x24] sm:$0xf]
    %v109 = vld [vmem:[#allocation5 + $0x28] sm:$0xf]
    %v110 = vld [vmem:[#allocation5 + $0x2c] sm:$0xf]
    %v111 = vld [vmem:[#allocation5 + $0x30] sm:$0xf]
    %v112 = vld [vmem:[#allocation5 + $0x34] sm:$0xf]
    %v113 = vld [vmem:[#allocation5 + $0x38] sm:$0xf]
    %v114 = vld [vmem:[#allocation5 + $0x3c] sm:$0xf]
    %v115 = vld [vmem:[#allocation5 + $0x40] sm:$0xf]
    %v116 = vld [vmem:[#allocation5 + $0x44] sm:$0xf]
    %v117 = vlaneseq
    %v118 = vshrl.u32 %v117, 7
    %v119 = vsub.s32 1, %v118
    %v120 = vrot.slane %v40, %v119
    %v137 = vunpack.c.l.b16 %v101
    %v138 = vunpack.c.l.b16 %v102
    %v139 = vunpack.c.l.b16 %v103
    %v140 = vunpack.c.l.b16 %v104
    %v141 = vunpack.c.l.b16 %v105
    %v142 = vunpack.c.l.b16 %v106
    %v143 = vunpack.c.l.b16 %v107
    %v144 = vunpack.c.l.b16 %v108
    %v145 = vunpack.c.l.b16 %v109
    %v146 = vunpack.c.l.b16 %v110
    %v147 = vunpack.c.l.b16 %v111
    %v148 = vunpack.c.l.b16 %v112
    %v149 = vunpack.c.l.b16 %v113
    %v150 = vunpack.c.l.b16 %v114
    %v151 = vunpack.c.l.b16 %v115
    %v152 = vunpack.c.l.b16 %v116
    %v153 = vpack.c.b16 %v138, %v137
    %v154 = vpack.c.b16 %v140, %v139
    %v155 = vpack.c.b16 %v142, %v141
    %v156 = vpack.c.b16 %v144, %v143
    %v157 = vpack.c.b16 %v146, %v145
    %v158 = vpack.c.b16 %v148, %v147
    %v159 = vpack.c.b16 %v150, %v149
    %v160 = vpack.c.b16 %v152, %v151
    %169 = vmatprep.subr.bf16.mxu0 0
    %170 = vmatpush1.bf16.msra.mxu0 %v153
    %171 = vmatprep.subr.bf16.mxu0 0
    %172 = vmatpush1.bf16.msra.mxu0 %v154
    %173 = vmatprep.subr.bf16.mxu0 0
    %174 = vmatpush1.bf16.msra.mxu0 %v155
    %175 = vmatprep.subr.bf16.mxu0 0
    %176 = vmatpush1.bf16.msra.mxu0 %v156
    %177 = vmatprep.subr.bf16.mxu0 0
    %178 = vmatpush1.bf16.msra.mxu0 %v157
    %179 = vmatprep.subr.bf16.mxu0 0
    %180 = vmatpush1.bf16.msra.mxu0 %v158
    %181 = vmatprep.subr.bf16.mxu0 0
    %182 = vmatpush1.bf16.msra.mxu0 %v159
    %183 = vmatprep.subr.bf16.mxu0 0
    %184 = vmatpush1.bf16.msra.mxu0 %v160
    %185 = vmatprep.subr.bf16.mxu0 0
    %186 = vmatpush1.bf16.msra.mxu0 0
    %187 = vmatprep.subr.bf16.mxu0 0
    %188 = vmatpush1.bf16.msra.mxu0 0
    %189 = vmatprep.subr.bf16.mxu0 0
    %190 = vmatpush1.bf16.msra.mxu0 0
    %191 = vmatprep.subr.bf16.mxu0 0
    %192 = vmatpush1.bf16.msra.mxu0 0
    %193 = vmatprep.subr.bf16.mxu0 0
    %194 = vmatpush1.bf16.msra.mxu0 0
    %195 = vmatprep.subr.bf16.mxu0 0
    %196 = vmatpush1.bf16.msra.mxu0 0
    %197 = vmatprep.subr.bf16.mxu0 0
    %198 = vmatpush1.bf16.msra.mxu0 0
    %199 = vmatprep.subr.bf16.mxu0 0
    %200 = vmatpush1.bf16.msra.mxu0 0
    %201 = vmatprep.mubr.bf16.mxu0 0
    %202 = vmatmul.mubr.bf16.gmra.mrb[0].mxu0 %v100
    %v203 = vpop.f32.mrb[0].mxu0
    %v204 = vadd.f32 %v120, %v203
    %v205 = vpop.f32.mrb[0].mxu0
    %v206 = vpop.f32.mrb[0].mxu0
    %v207 = vpop.f32.mrb[0].mxu0
    %208 = vdwg.mxu0
    %v209 = vmax.f32 %v204, 0.0
    %v210 = vpack.c.bf16 %v209, %v209
    %v211 = vld [vmem:[#allocation5 + $0x48] sm:$0xf]
    %v212 = vld [vmem:[#allocation5 + $0x4c] sm:$0xf]
    %v213 = vld [vmem:[#allocation5 + $0x50] sm:$0xf]
    %v214 = vld [vmem:[#allocation5 + $0x54] sm:$0xf]
    %v215 = vld [vmem:[#allocation5 + $0x58] sm:$0xf]
    %v216 = vld [vmem:[#allocation5 + $0x5c] sm:$0xf]
    %v217 = vld [vmem:[#allocation5 + $0x60] sm:$0xf]
    %v218 = vld [vmem:[#allocation5 + $0x64] sm:$0xf]
    %v219 = vld [vmem:[#allocation5 + $0x68] sm:$0xf]
    %v220 = vld [vmem:[#allocation5 + $0x6c] sm:$0xf]
    %v221 = vld [vmem:[#allocation5 + $0x70] sm:$0xf]
    %v222 = vld [vmem:[#allocation5 + $0x74] sm:$0xf]
    %v223 = vld [vmem:[#allocation5 + $0x78] sm:$0xf]
    %v224 = vld [vmem:[#allocation5 + $0x7c] sm:$0xf]
    %v225 = vld [vmem:[#allocation5 + $0x80] sm:$0xf]
    %v226 = vld [vmem:[#allocation5 + $0x84] sm:$0xf]
    %v227 = vlaneseq
    %v228 = vshrl.u32 %v227, 7
    %v229 = vsub.s32 2, %v228
    %v230 = vrot.slane %v40, %v229
    %v247 = vunpack.c.l.b16 %v211
    %v248 = vunpack.c.l.b16 %v212
    %v249 = vunpack.c.l.b16 %v213
    %v250 = vunpack.c.l.b16 %v214
    %v251 = vunpack.c.l.b16 %v215
    %v252 = vunpack.c.l.b16 %v216
    %v253 = vunpack.c.l.b16 %v217
    %v254 = vunpack.c.l.b16 %v218
    %v255 = vunpack.c.l.b16 %v219
    %v256 = vunpack.c.l.b16 %v220
    %v257 = vunpack.c.l.b16 %v221
    %v258 = vunpack.c.l.b16 %v222
    %v259 = vunpack.c.l.b16 %v223
    %v260 = vunpack.c.l.b16 %v224
    %v261 = vunpack.c.l.b16 %v225
    %v262 = vunpack.c.l.b16 %v226
    %v263 = vpack.c.b16 %v248, %v247
    %v264 = vpack.c.b16 %v250, %v249
    %v265 = vpack.c.b16 %v252, %v251
    %v266 = vpack.c.b16 %v254, %v253
    %v267 = vpack.c.b16 %v256, %v255
    %v268 = vpack.c.b16 %v258, %v257
    %v269 = vpack.c.b16 %v260, %v259
    %v270 = vpack.c.b16 %v262, %v261
    %279 = vmatprep.subr.bf16.mxu0 0
    %280 = vmatpush1.bf16.msra.mxu0 %v263
    %281 = vmatprep.subr.bf16.mxu0 0
    %282 = vmatpush1.bf16.msra.mxu0 %v264
    %283 = vmatprep.subr.bf16.mxu0 0
    %284 = vmatpush1.bf16.msra.mxu0 %v265
    %285 = vmatprep.subr.bf16.mxu0 0
    %286 = vmatpush1.bf16.msra.mxu0 %v266
    %287 = vmatprep.subr.bf16.mxu0 0
    %288 = vmatpush1.bf16.msra.mxu0 %v267
    %289 = vmatprep.subr.bf16.mxu0 0
    %290 = vmatpush1.bf16.msra.mxu0 %v268
    %291 = vmatprep.subr.bf16.mxu0 0
    %292 = vmatpush1.bf16.msra.mxu0 %v269
    %293 = vmatprep.subr.bf16.mxu0 0
    %294 = vmatpush1.bf16.msra.mxu0 %v270
    %295 = vmatprep.subr.bf16.mxu0 0
    %296 = vmatpush1.bf16.msra.mxu0 0
    %297 = vmatprep.subr.bf16.mxu0 0
    %298 = vmatpush1.bf16.msra.mxu0 0
    %299 = vmatprep.subr.bf16.mxu0 0
    %300 = vmatpush1.bf16.msra.mxu0 0
    %301 = vmatprep.subr.bf16.mxu0 0
    %302 = vmatpush1.bf16.msra.mxu0 0
    %303 = vmatprep.subr.bf16.mxu0 0
    %304 = vmatpush1.bf16.msra.mxu0 0
    %305 = vmatprep.subr.bf16.mxu0 0
    %306 = vmatpush1.bf16.msra.mxu0 0
    %307 = vmatprep.subr.bf16.mxu0 0
    %308 = vmatpush1.bf16.msra.mxu0 0
    %309 = vmatprep.subr.bf16.mxu0 0
    %310 = vmatpush1.bf16.msra.mxu0 0
    %311 = vmatprep.mubr.bf16.mxu0 0
    %312 = vmatmul.mubr.bf16.gmra.mrb[0].mxu0 %v210
    %v313 = vpop.f32.mrb[0].mxu0
    %v314 = vadd.f32 %v230, %v313
    %v315 = vpop.f32.mrb[0].mxu0
    %v316 = vpop.f32.mrb[0].mxu0
    %v317 = vpop.f32.mrb[0].mxu0
    %318 = vdwg.mxu0
    %v319 = vmax.f32 %v314, 0.0
    %v320 = vpack.c.bf16 %v319, %v319
    %v321 = vld [vmem:[#allocation5 + $0x88] sm:$0xf]
    %v322 = vld [vmem:[#allocation5 + $0x8c] sm:$0xf]
    %v323 = vld [vmem:[#allocation5 + $0x90] sm:$0xf]
    %v324 = vld [vmem:[#allocation5 + $0x94] sm:$0xf]
    %v325 = vld [vmem:[#allocation5 + $0x98] sm:$0xf]
    %v326 = vld [vmem:[#allocation5 + $0x9c] sm:$0xf]
    %v327 = vld [vmem:[#allocation5 + $0xa0] sm:$0xf]
    %v328 = vld [vmem:[#allocation5 + $0xa4] sm:$0xf]
    %v329 = vld [vmem:[#allocation5 + $0xa8] sm:$0xf]
    %v330 = vld [vmem:[#allocation5 + $0xac] sm:$0xf]
    %v331 = vld [vmem:[#allocation5 + $0xb0] sm:$0xf]
    %v332 = vld [vmem:[#allocation5 + $0xb4] sm:$0xf]
    %v333 = vld [vmem:[#allocation5 + $0xb8] sm:$0xf]
    %v334 = vld [vmem:[#allocation5 + $0xbc] sm:$0xf]
    %v335 = vld [vmem:[#allocation5 + $0xc0] sm:$0xf]
    %v336 = vld [vmem:[#allocation5 + $0xc4] sm:$0xf]
    %v337 = vlaneseq
    %v338 = vshrl.u32 %v337, 7
    %v339 = vsub.s32 3, %v338
    %v340 = vrot.slane %v40, %v339
    %v357 = vunpack.c.l.b16 %v321
    %v358 = vunpack.c.l.b16 %v322
    %v359 = vunpack.c.l.b16 %v323
    %v360 = vunpack.c.l.b16 %v324
    %v361 = vunpack.c.l.b16 %v325
    %v362 = vunpack.c.l.b16 %v326
    %v363 = vunpack.c.l.b16 %v327
    %v364 = vunpack.c.l.b16 %v328
    %v365 = vunpack.c.l.b16 %v329
    %v366 = vunpack.c.l.b16 %v330
    %v367 = vunpack.c.l.b16 %v331
    %v368 = vunpack.c.l.b16 %v332
    %v369 = vunpack.c.l.b16 %v333
    %v370 = vunpack.c.l.b16 %v334
    %v371 = vunpack.c.l.b16 %v335
    %v372 = vunpack.c.l.b16 %v336
    %v373 = vpack.c.b16 %v358, %v357
    %v374 = vpack.c.b16 %v360, %v359
    %v375 = vpack.c.b16 %v362, %v361
    %v376 = vpack.c.b16 %v364, %v363
    %v377 = vpack.c.b16 %v366, %v365
    %v378 = vpack.c.b16 %v368, %v367
    %v379 = vpack.c.b16 %v370, %v369
    %v380 = vpack.c.b16 %v372, %v371
    %389 = vmatprep.subr.bf16.mxu0 0
    %390 = vmatpush1.bf16.msra.mxu0 %v373
    %391 = vmatprep.subr.bf16.mxu0 0
    %392 = vmatpush1.bf16.msra.mxu0 %v374
    %393 = vmatprep.subr.bf16.mxu0 0
    %394 = vmatpush1.bf16.msra.mxu0 %v375
    %395 = vmatprep.subr.bf16.mxu0 0
    %396 = vmatpush1.bf16.msra.mxu0 %v376
    %397 = vmatprep.subr.bf16.mxu0 0
    %398 = vmatpush1.bf16.msra.mxu0 %v377
    %399 = vmatprep.subr.bf16.mxu0 0
    %400 = vmatpush1.bf16.msra.mxu0 %v378
    %401 = vmatprep.subr.bf16.mxu0 0
    %402 = vmatpush1.bf16.msra.mxu0 %v379
    %403 = vmatprep.subr.bf16.mxu0 0
    %404 = vmatpush1.bf16.msra.mxu0 %v380
    %405 = vmatprep.subr.bf16.mxu0 0
    %406 = vmatpush1.bf16.msra.mxu0 0
    %407 = vmatprep.subr.bf16.mxu0 0
    %408 = vmatpush1.bf16.msra.mxu0 0
    %409 = vmatprep.subr.bf16.mxu0 0
    %410 = vmatpush1.bf16.msra.mxu0 0
    %411 = vmatprep.subr.bf16.mxu0 0
    %412 = vmatpush1.bf16.msra.mxu0 0
    %413 = vmatprep.subr.bf16.mxu0 0
    %414 = vmatpush1.bf16.msra.mxu0 0
    %415 = vmatprep.subr.bf16.mxu0 0
    %416 = vmatpush1.bf16.msra.mxu0 0
    %417 = vmatprep.subr.bf16.mxu0 0
    %418 = vmatpush1.bf16.msra.mxu0 0
    %419 = vmatprep.subr.bf16.mxu0 0
    %420 = vmatpush1.bf16.msra.mxu0 0
    %421 = vmatprep.mubr.bf16.mxu0 0
    %422 = vmatmul.mubr.bf16.gmra.mrb[0].mxu0 %v320
    %v423 = vpop.f32.mrb[0].mxu0
    %v424 = vadd.f32 %v340, %v423
    %v425 = vpop.f32.mrb[0].mxu0
    %v426 = vpop.f32.mrb[0].mxu0
    %v427 = vpop.f32.mrb[0].mxu0
    %428 = vdwg.mxu0
    %vm429 = vcmask 64512
    %430 = vst.msk [vmem:[#allocation7] sm:$0xff] %vm429, %v424
    // Predicated region
    $region18: #{tpu_custom_call.1} parent=1 // pred_check
      _
    $region19: #{tpu_custom_call.1} parent=1 // pred_check_branch
      %432 = sbr.rel (0) target = $region21
    $region20: #{tpu_custom_call.1} parent=1 // pred_region
      %s434 = ssub.s32 128, 128
      %435 = vsyncadd [#allocation4], %s434
      %s437 = sshll.u32 [#allocation7], 4
      %s438 = int_to_ptr.vmem [resolvable:$true] %s437
      %440 = dma.vmem_to_hbm [thread:$0]  %s438, 128, %s2, [#allocation4]
    $region21: #{tpu_custom_call.1} parent=1 // pred_fallthru
      _
    // Predicated region
    $region22: #{tpu_custom_call.1} parent=1 // pred_check
      _
    $region23: #{tpu_custom_call.1} parent=1 // pred_check_branch
      %442 = sbr.rel (0) target = $region25
    $region24: #{tpu_custom_call.1} parent=1 // pred_region
      %443 = dma.done [#allocation4], 128
    $region25: #{tpu_custom_call.1} parent=1 // pred_fallthru
      _
    %444 = vsyncpa [#allocation3], 1
    %445 = vsyncpa [#allocation6], 1
    %446 = vsyncpa [#allocation4], 1

</llo_original>
